<compile_context>
chip_gen: v6e
topology: v6e:2x2x1
jax: 0.10.0
libtpu: 0.0.40
codegen_flags: <defaults>
</compile_context>

<pallas_src>
import functools

import jax
import jax.numpy as jnp
from jax.experimental import pallas as pl
from jax.experimental.pallas import tpu as pltpu

LANE = 128


def _cdiv(a, b):
    return -(-a // b)


def _dc_topk_tile_kernel(logits_ref, tgt_ref, ce_ref, dice_ref, *,
                         total_hw, needs_mask):
    """One spatial tile: per-pixel CE + merged dice partial sums.

    logits_ref: (B, C, Ts, 128) native float dtype (f32 / bf16)
    tgt_ref:    (B, Ts, 128)    int32 labels
    ce_ref:     (B, Ts, 128)    f32 per-pixel cross entropy (-inf on padded px)
    dice_ref:   (1, 2, B, C)    f32 [intersect ; sum_pred + sum_gt] partials
    """
    x = logits_ref[...].astype(jnp.float32)          # per-tile cast, stays in VMEM
    tgt = tgt_ref[...]                               # (B, Ts, L) int32
    B, C, Ts, L = x.shape

    # Channel-selection mask, computed once and reused (dice sums + CE gather).
    ch = jax.lax.broadcasted_iota(jnp.int32, (B, C, Ts, L), 1)
    sel = ch == tgt[:, None, :, :]                   # (B, C, Ts, L) bool

    # Numerically stable softmax over the channel axis.  With the spatial axis
    # on (sublane, lane), these channel reduces are cheap VPU vreg combines.
    m = jnp.max(x, axis=1, keepdims=True)            # (B, 1, Ts, L)
    e = jnp.exp(x - m)                               # (B, C, Ts, L)
    s = jnp.sum(e, axis=1, keepdims=True)            # (B, 1, Ts, L)
    probs = e / s                                    # exact recip (exp dominates EUP)

    if needs_mask:
        # Padded pixels live at flat spatial indices >= total_hw.
        base = pl.program_id(0) * (Ts * L)
        pos = (jax.lax.broadcasted_iota(jnp.int32, (Ts, L), 0) * L
               + jax.lax.broadcasted_iota(jnp.int32, (Ts, L), 1))
        valid = (base + pos) < total_hw              # (Ts, L) bool
        valid_b = valid[None, None, :, :]
        sel_d = jnp.logical_and(sel, valid_b)
        probs_d = jnp.where(valid_b, probs, 0.0)
    else:
        sel_d = sel
        probs_d = probs

    def _sum_sp(a):                                  # reduce the two spatial axes
        return jnp.sum(jnp.sum(a, axis=3), axis=2)   # -> (B, C)

    # Dice partial sums for this tile (no materialized one-hot).
    inter = _sum_sp(jnp.where(sel_d, probs, 0.0))                       # tp
    denom = _sum_sp(probs_d) + _sum_sp(jnp.where(sel_d, 1.0, 0.0))      # pred + gt
    dice_ref[0, 0, :, :] = inter
    dice_ref[0, 1, :, :] = denom

    # Per-pixel cross entropy: logsumexp - logit[target] (exact log path).
    lse = m[:, 0] + jnp.log(s[:, 0])                 # (B, Ts, L)
    logit_t = jnp.sum(jnp.where(sel, x, 0.0), axis=1)
    ce = lse - logit_t
    if needs_mask:
        ce = jnp.where(valid[None, :, :], ce, -jnp.inf)
    ce_ref[...] = ce


def _pick_tile_s(B, C, S, itemsize,
                 target_bytes=4 * 1024 * 1024,
                 vmem_budget=36 * 1024 * 1024):
    """tile_s = #(sublane rows of 128 pixels) per grid step; multiple of 8."""
    row_in = B * C * LANE * itemsize                 # logits bytes per row
    row_f32 = B * C * LANE * 4                       # f32 intermediate bytes per row
    row_aux = B * LANE * 4                           # label / CE bytes per row
    # HBM-bound (v5e/v6e): stream a few MiB of logits per step.
    t_target = max(1, target_bytes // max(row_in, 1))
    # VMEM-bound (v7x, 64 MiB): ~6 live f32 intermediates + double-buffered I/O.
    per_row = 6 * row_f32 + 2 * row_in + 4 * row_aux
    t_budget = max(1, vmem_budget // per_row)
    tile_s = min(t_target, t_budget)
    tile_s = max(8, (tile_s // 8) * 8)               # (8,128) block constraint
    if S > 8:
        # >= 2 grid steps so "parallel" can shard across both v7x TensorCores.
        tile_s = min(tile_s, _cdiv(_cdiv(S, 2), 8) * 8)
    tile_s = min(tile_s, _cdiv(S, 8) * 8)            # never exceed padded problem
    return tile_s


def dc_and_topk_loss(net_output, target, *, weight_ce=1.0, weight_dice=1.0,
                     smooth=1.0, topk_percent=10.0, tile_hw=None):
    """net_output: (B, C, H, W) float logits (f32 or bf16);
    target: (B, 1, H, W) integer labels."""
    B, C, H, W = net_output.shape
    assert target.shape == (B, 1, H, W)
    HW = H * W

    itemsize = jnp.dtype(net_output.dtype).itemsize
    S = _cdiv(HW, LANE)                              # sublane rows of pixels

    if tile_hw is not None:
        assert tile_hw % (8 * LANE) == 0, tile_hw
        tile_s = tile_hw // LANE
    else:
        tile_s = _pick_tile_s(B, C, S, itemsize)
    num_tiles = _cdiv(S, tile_s)
    S_pad = num_tiles * tile_s
    HW_pad = S_pad * LANE
    needs_mask = HW_pad != HW

    # Put the spatial axis on (sublane, lane): contiguous (free) reshape.
    logits = net_output.reshape(B, C, HW)            # keep native dtype (bf16 ok)
    # TODO(synk): keep labels int8/int16 (and logits bf16) end-to-end upstream to
    # cut streamed HBM bytes; the kernel already casts per tile.
    tgt = target.reshape(B, HW).astype(jnp.int32)
    if needs_mask:
        pad = HW_pad - HW
        logits = jnp.pad(logits, ((0, 0), (0, 0), (0, pad)))
        tgt = jnp.pad(tgt, ((0, 0), (0, pad)))
    logits = logits.reshape(B, C, S_pad, LANE)
    tgt = tgt.reshape(B, S_pad, LANE)

    kernel = functools.partial(_dc_topk_tile_kernel, total_hw=HW,
                               needs_mask=needs_mask)

    grid_spec = pltpu.PrefetchScalarGridSpec(
        num_scalar_prefetch=0,
        grid=(num_tiles,),
        in_specs=[
            pl.BlockSpec((B, C, tile_s, LANE), lambda i: (0, 0, i, 0)),
            pl.BlockSpec((B, tile_s, LANE), lambda i: (0, i, 0)),
        ],
        out_specs=[
            pl.BlockSpec((B, tile_s, LANE), lambda i: (0, i, 0)),   # CE tile
            pl.BlockSpec((1, 2, B, C), lambda i: (i, 0, 0, 0)),     # dice partials
        ],
    )

    # Scoped-VMEM cap: ~3/4 of physical VMEM (~96 MiB v5e/v6e, ~48 MiB v7x).
    try:
        vmem_cap = int(pltpu.get_tpu_info().vmem_capacity_bytes)
    except Exception:
        vmem_cap = 64 * 1024 * 1024
    vmem_limit = min(vmem_cap * 3 // 4, 110 * 1024 * 1024)

    ce_map, dice_p = pl.pallas_call(
        kernel,
        out_shape=(
            jax.ShapeDtypeStruct((B, S_pad, LANE), jnp.float32),
            jax.ShapeDtypeStruct((num_tiles, 2, B, C), jnp.float32),
        ),
        grid_spec=grid_spec,
        compiler_params=pltpu.CompilerParams(
            # No cross-step carried state -> tiles shard across TensorCores.
            dimension_semantics=("parallel",),
            vmem_limit_bytes=vmem_limit,
        ),
    )(logits, tgt)

    # ---- Dice finalize (tiny: num_tiles x 2 x B x C) ----
    intersect = jnp.sum(dice_p[:, 0], axis=0)        # (B, C)
    denom = jnp.sum(dice_p[:, 1], axis=0)            # (B, C) == sum_pred + sum_gt
    dc = (2.0 * intersect + smooth) / jnp.maximum(denom + smooth, 1e-8)
    dc_loss = -jnp.mean(dc)

    # ---- TopK cross entropy finalize ----
    # TODO(synk): for large CE maps, a per-tile histogram + k-th-value threshold
    # (two streaming passes) would avoid this global O(N log N) sort; padded
    # pixels are already -inf so they never enter the top-k pool.
    num_voxels = B * HW
    k_count = max(int(num_voxels * topk_percent / 100.0), 1)
    topk_vals, _ = jax.lax.top_k(ce_map.reshape(-1), k_count)
    ce_loss = jnp.mean(topk_vals)

    return weight_ce * ce_loss + weight_dice * dc_loss


def _reference(net_output, target, *, weight_ce=1.0, weight_dice=1.0,
               smooth=1.0, topk_percent=10.0):
    # Pure-JAX reference mirroring the PyTorch DC_and_topk_loss forward.
    B, C, H, W = net_output.shape
    x = net_output.astype(jnp.float32)
    probs = jax.nn.softmax(x, axis=1)
    onehot = jax.nn.one_hot(target[:, 0], C, axis=1, dtype=jnp.float32)
    axes = (2, 3)
    tp = jnp.sum(probs * onehot, axis=axes)
    sum_pred = jnp.sum(probs, axis=axes)
    sum_gt = jnp.sum(onehot, axis=axes)
    dc = (2.0 * tp + smooth) / jnp.maximum(sum_pred + sum_gt + smooth, 1e-8)
    dc_loss = -jnp.mean(dc)
    logp = jax.nn.log_softmax(x, axis=1)
    ce_px = -jnp.sum(onehot * logp, axis=1)          # (B, H, W) reduction='none'
    k_count = max(int(B * H * W * topk_percent / 100.0), 1)
    ce_loss = jnp.mean(jax.lax.top_k(ce_px.reshape(-1), k_count)[0])
    return weight_ce * ce_loss + weight_dice * dc_loss


if __name__ == "__main__":
    key = jax.random.PRNGKey(0)

    # Case 1: small aligned shape (spatial=16) -> single tile, padded/masked tail.
    k1, k2 = jax.random.split(key)
    B, C, H, W = 2, 4, 16, 16
    x1 = jax.random.normal(k1, (B, C, H, W), dtype=jnp.float32)
    t1 = jax.random.randint(k2, (B, 1, H, W), 0, C, dtype=jnp.int32)
    loss1 = jax.block_until_ready(dc_and_topk_loss(x1, t1))
    ref1 = _reference(x1, t1)
    assert jnp.allclose(loss1, ref1, rtol=1e-4, atol=1e-4), (loss1, ref1)

    # Case 2: awkward spatial size + odd channel count -> multi-tile "parallel"
    # grid with masked padding (exercises the pipelined multi-step path).
    k3, k4 = jax.random.split(k1)
    B2, C2, H2, W2 = 2, 3, 40, 52
    x2 = jax.random.normal(k3, (B2, C2, H2, W2), dtype=jnp.float32)
    t2 = jax.random.randint(k4, (B2, 1, H2, W2), 0, C2, dtype=jnp.int32)
    loss2 = jax.block_until_ready(dc_and_topk_loss(x2, t2))
    ref2 = _reference(x2, t2)
    assert jnp.allclose(loss2, ref2, rtol=1e-4, atol=1e-4), (loss2, ref2)

    print("KERNEL_OK")
</pallas_src>

<mosaic_0001>
module attributes {stable_mosaic.version = 11 : i64} {
  func.func @_dc_topk_tile_kernel(%arg0: i32, %arg1: memref<2x4x8x128xf32, #tpu.memory_space<vmem>>, %arg2: memref<2x8x128xi32, #tpu.memory_space<vmem>>, %arg3: memref<2x8x128xf32, #tpu.memory_space<vmem>>, %arg4: memref<1x2x2x4xf32, #tpu.memory_space<vmem>>) attributes {dimension_semantics = [#tpu.dimension_semantics<parallel>], iteration_bounds = array<i64: 1>, scalar_prefetch = 0 : i64, scratch_operands = 0 : i64, tpu.core_type = #tpu.core_type<tc>, window_params = [{transform_indices = @transform_0, window_bounds = array<i64: 2, 4, 8, 128>}, {transform_indices = @transform_1, window_bounds = array<i64: 2, 8, 128>}, {transform_indices = @transform_2, window_bounds = array<i64: 2, 8, 128>}, {transform_indices = @transform_3, window_bounds = array<i64: 1, 2, 2, 4>}]} {
    %c0 = arith.constant 0 : index
    %c0_0 = arith.constant 0 : index
    %c0_1 = arith.constant 0 : index
    %c0_2 = arith.constant 0 : index
    %0 = vector.load %arg1[%c0, %c0_0, %c0_1, %c0_2] : memref<2x4x8x128xf32, #tpu.memory_space<vmem>>, vector<2x4x8x128xf32>
    %c0_3 = arith.constant 0 : index
    %c0_4 = arith.constant 0 : index
    %c0_5 = arith.constant 0 : index
    %1 = vector.load %arg2[%c0_3, %c0_4, %c0_5] : memref<2x8x128xi32, #tpu.memory_space<vmem>>, vector<2x8x128xi32>
    %2 = tpu.iota {dimensions = array<i32: 1>} : vector<2x4x8x128xi32>
    %3 = vector.shape_cast %1 : vector<2x8x128xi32> to vector<2x1x8x128xi32>
    %4 = vector.broadcast %3 : vector<2x1x8x128xi32> to vector<2x4x8x128xi32>
    %5 = arith.cmpi eq, %2, %4 : vector<2x4x8x128xi32>
    %cst = arith.constant dense<0xFF800000> : vector<2x8x128xf32>
    %6 = vector.multi_reduction <maximumf>, %0, %cst [1] : vector<2x4x8x128xf32> to vector<2x8x128xf32>
    %7 = vector.shape_cast %6 : vector<2x8x128xf32> to vector<2x1x8x128xf32>
    %8 = vector.broadcast %7 : vector<2x1x8x128xf32> to vector<2x4x8x128xf32>
    %9 = arith.subf %0, %8 : vector<2x4x8x128xf32>
    %10 = math.exp %9 : vector<2x4x8x128xf32>
    %cst_6 = arith.constant dense<0.000000e+00> : vector<2x8x128xf32>
    %11 = vector.multi_reduction <add>, %10, %cst_6 [1] : vector<2x4x8x128xf32> to vector<2x8x128xf32>
    %12 = vector.shape_cast %11 : vector<2x8x128xf32> to vector<2x1x8x128xf32>
    %13 = vector.broadcast %12 : vector<2x1x8x128xf32> to vector<2x4x8x128xf32>
    %14 = arith.divf %10, %13 : vector<2x4x8x128xf32>
    %c1024_i32 = arith.constant 1024 : i32
    %15 = arith.muli %arg0, %c1024_i32 : i32
    %16 = tpu.iota {dimensions = array<i32: 0>} : vector<8x128xi32>
    %c128_i32 = arith.constant 128 : i32
    %17 = vector.broadcast %c128_i32 : i32 to vector<8x128xi32>
    %18 = arith.muli %16, %17 : vector<8x128xi32>
    %19 = tpu.iota {dimensions = array<i32: 1>} : vector<8x128xi32>
    %20 = arith.addi %18, %19 : vector<8x128xi32>
    %21 = vector.broadcast %15 : i32 to vector<8x128xi32>
    %22 = arith.addi %21, %20 : vector<8x128xi32>
    %c256_i32 = arith.constant 256 : i32
    %23 = vector.broadcast %c256_i32 : i32 to vector<8x128xi32>
    %24 = arith.cmpi slt, %22, %23 : vector<8x128xi32>
    %25 = vector.shape_cast %24 : vector<8x128xi1> to vector<1x1x8x128xi1>
    %26 = vector.broadcast %25 : vector<1x1x8x128xi1> to vector<2x4x8x128xi1>
    %27 = arith.andi %5, %26 : vector<2x4x8x128xi1>
    %cst_7 = arith.constant 0.000000e+00 : f32
    %28 = vector.shape_cast %25 : vector<1x1x8x128xi1> to vector<1x1x8x128xi1>
    %29 = vector.broadcast %28 : vector<1x1x8x128xi1> to vector<2x4x8x128xi1>
    %30 = vector.broadcast %cst_7 : f32 to vector<2x4x8x128xf32>
    %31 = arith.select %29, %14, %30 : vector<2x4x8x128xi1>, vector<2x4x8x128xf32>
    %cst_8 = arith.constant 0.000000e+00 : f32
    %32 = vector.broadcast %cst_8 : f32 to vector<2x4x8x128xf32>
    %33 = arith.select %27, %14, %32 : vector<2x4x8x128xi1>, vector<2x4x8x128xf32>
    %cst_9 = arith.constant dense<0.000000e+00> : vector<2x4x8xf32>
    %34 = vector.multi_reduction <add>, %33, %cst_9 [3] : vector<2x4x8x128xf32> to vector<2x4x8xf32>
    %cst_10 = arith.constant dense<0.000000e+00> : vector<2x4xf32>
    %35 = vector.multi_reduction <add>, %34, %cst_10 [2] : vector<2x4x8xf32> to vector<2x4xf32>
    %cst_11 = arith.constant dense<0.000000e+00> : vector<2x4x8xf32>
    %36 = vector.multi_reduction <add>, %31, %cst_11 [3] : vector<2x4x8x128xf32> to vector<2x4x8xf32>
    %cst_12 = arith.constant dense<0.000000e+00> : vector<2x4xf32>
    %37 = vector.multi_reduction <add>, %36, %cst_12 [2] : vector<2x4x8xf32> to vector<2x4xf32>
    %cst_13 = arith.constant 1.000000e+00 : f32
    %cst_14 = arith.constant 0.000000e+00 : f32
    %38 = vector.broadcast %cst_13 : f32 to vector<2x4x8x128xf32>
    %39 = vector.broadcast %cst_14 : f32 to vector<2x4x8x128xf32>
    %40 = arith.select %27, %38, %39 : vector<2x4x8x128xi1>, vector<2x4x8x128xf32>
    %cst_15 = arith.constant dense<0.000000e+00> : vector<2x4x8xf32>
    %41 = vector.multi_reduction <add>, %40, %cst_15 [3] : vector<2x4x8x128xf32> to vector<2x4x8xf32>
    %cst_16 = arith.constant dense<0.000000e+00> : vector<2x4xf32>
    %42 = vector.multi_reduction <add>, %41, %cst_16 [2] : vector<2x4x8xf32> to vector<2x4xf32>
    %43 = arith.addf %37, %42 : vector<2x4xf32>
    %c0_17 = arith.constant 0 : index
    %c0_18 = arith.constant 0 : index
    %c0_19 = arith.constant 0 : index
    %c0_20 = arith.constant 0 : index
    %44 = vector.load %arg4[%c0_17, %c0_18, %c0_19, %c0_20] : memref<1x2x2x4xf32, #tpu.memory_space<vmem>>, vector<1x1x2x4xf32>
    %45 = vector.shape_cast %44 : vector<1x1x2x4xf32> to vector<2x4xf32>
    %46 = vector.shape_cast %35 : vector<2x4xf32> to vector<1x1x2x4xf32>
    tpu.vector_store %arg4[%c0_17, %c0_18, %c0_19, %c0_20], %46 {strides = array<i32>} : memref<1x2x2x4xf32, #tpu.memory_space<vmem>>, vector<1x1x2x4xf32>,
    %c0_21 = arith.constant 0 : index
    %c1 = arith.constant 1 : index
    %c0_22 = arith.constant 0 : index
    %c0_23 = arith.constant 0 : index
    %47 = vector.load %arg4[%c0_21, %c1, %c0_22, %c0_23] : memref<1x2x2x4xf32, #tpu.memory_space<vmem>>, vector<1x1x2x4xf32>
    %48 = vector.shape_cast %47 : vector<1x1x2x4xf32> to vector<2x4xf32>
    %49 = vector.shape_cast %43 : vector<2x4xf32> to vector<1x1x2x4xf32>
    tpu.vector_store %arg4[%c0_21, %c1, %c0_22, %c0_23], %49 {strides = array<i32>} : memref<1x2x2x4xf32, #tpu.memory_space<vmem>>, vector<1x1x2x4xf32>,
    %50 = vector.shape_cast %7 : vector<2x1x8x128xf32> to vector<2x8x128xf32>
    %51 = vector.shape_cast %12 : vector<2x1x8x128xf32> to vector<2x8x128xf32>
    %52 = math.log %51 : vector<2x8x128xf32>
    %53 = arith.addf %50, %52 : vector<2x8x128xf32>
    %cst_24 = arith.constant 0.000000e+00 : f32
    %54 = vector.broadcast %cst_24 : f32 to vector<2x4x8x128xf32>
    %55 = arith.select %5, %0, %54 : vector<2x4x8x128xi1>, vector<2x4x8x128xf32>
    %cst_25 = arith.constant dense<0.000000e+00> : vector<2x8x128xf32>
    %56 = vector.multi_reduction <add>, %55, %cst_25 [1] : vector<2x4x8x128xf32> to vector<2x8x128xf32>
    %57 = arith.subf %53, %56 : vector<2x8x128xf32>
    %58 = vector.shape_cast %24 : vector<8x128xi1> to vector<1x8x128xi1>
    %cst_26 = arith.constant 0xFF800000 : f32
    %59 = vector.shape_cast %58 : vector<1x8x128xi1> to vector<1x8x128xi1>
    %60 = vector.broadcast %59 : vector<1x8x128xi1> to vector<2x8x128xi1>
    %61 = vector.broadcast %cst_26 : f32 to vector<2x8x128xf32>
    %62 = arith.select %60, %57, %61 : vector<2x8x128xi1>, vector<2x8x128xf32>
    %c0_27 = arith.constant 0 : index
    %c0_28 = arith.constant 0 : index
    %c0_29 = arith.constant 0 : index
    %63 = vector.load %arg3[%c0_27, %c0_28, %c0_29] : memref<2x8x128xf32, #tpu.memory_space<vmem>>, vector<2x8x128xf32>
    tpu.vector_store %arg3[%c0_27, %c0_28, %c0_29], %62 {strides = array<i32>} : memref<2x8x128xf32, #tpu.memory_space<vmem>>, vector<2x8x128xf32>,
    return
  }
  func.func @transform_0(%arg0: i32) -> (i32, i32, i32, i32) {
    %c0_i32 = arith.constant 0 : i32
    %c0_i32_0 = arith.constant 0 : i32
    %c0_i32_1 = arith.constant 0 : i32
    %c0_i32_2 = arith.constant 0 : i32
    return %c0_i32, %c0_i32_0, %arg0, %c0_i32_1 : i32, i32, i32, i32
  }
  func.func @transform_1(%arg0: i32) -> (i32, i32, i32) {
    %c0_i32 = arith.constant 0 : i32
    %c0_i32_0 = arith.constant 0 : i32
    %c0_i32_1 = arith.constant 0 : i32
    return %c0_i32, %arg0, %c0_i32_0 : i32, i32, i32
  }
  func.func @transform_2(%arg0: i32) -> (i32, i32, i32) {
    %c0_i32 = arith.constant 0 : i32
    %c0_i32_0 = arith.constant 0 : i32
    %c0_i32_1 = arith.constant 0 : i32
    return %c0_i32, %arg0, %c0_i32_0 : i32, i32, i32
  }
  func.func @transform_3(%arg0: i32) -> (i32, i32, i32, i32) {
    %c0_i32 = arith.constant 0 : i32
    %c0_i32_0 = arith.constant 0 : i32
    %c0_i32_1 = arith.constant 0 : i32
    %c0_i32_2 = arith.constant 0 : i32
    return %arg0, %c0_i32, %c0_i32_0, %c0_i32_1 : i32, i32, i32, i32
  }
}

</mosaic_0001>

<llo_original>
// kernel: tpu_custom_call.1
$region0: #{tpu_custom_call.1}
  #allocation0 [shape = 'u32[]', space=smem, size = 0x4, offset = 0x4, fixed_abs, tag = 'smem constant byte address 0x4 - core index']
  #allocation1 [shape = 'u32[144,128]{1,0:T(1,128)}', space=vmem, size = 0x12000, scoped, tag = 'internal scratch']
  %s0 = inlined_call_operand.hbm [shape: f32[2,4,8,128], index: 0, kind: input, shape index: {}]
  %s1 = inlined_call_operand.hbm [shape: s32[2,8,128], index: 1, kind: input, shape index: {}]
  %s2 = inlined_call_operand.hbm [shape: f32[2,8,128], index: 2, kind: output, shape index: {0}]
  %s3 = inlined_call_operand.hbm [shape: f32[1,2,2,4], index: 3, kind: output, shape index: {1}]
  %4 = xla_tuple %s2, %s3
  %s5 = sld [smem:[#allocation0]]
  $region34: #{tpu_custom_call.1} parent=0
    _
  %s7 = ssub.s32 1, %s5
  %s8 = scalar_select 0, %s7, %s5
  $region1: #{tpu_custom_call.1} parent=0
    #allocation2 [shape = 'u8[32768]{0}', space=vmem, size = 0x8000, scoped, tag = 'input window, operand 0, single buffered']
    #allocation3 [shape = 's32[1]{0}', space=sflag, size = 0x4, scoped, tag = 'scoped memory for tpu_custom_call.1']
    #allocation4 [shape = 's32[1]{0}', space=sflag, size = 0x4, scoped, tag = 'scoped memory for tpu_custom_call.1']
    #allocation5 [shape = 'u8[8192]{0}', space=vmem, size = 0x2000, scoped, tag = 'input window, operand 1, single buffered']
    #allocation6 [shape = 's32[1]{0}', space=sflag, size = 0x4, scoped, tag = 'scoped memory for tpu_custom_call.1']
    #allocation7 [shape = 'u8[8192]{0}', space=vmem, size = 0x2000, scoped, tag = 'output window, operand 0, single buffered']
    #allocation8 [shape = 'u8[2048]{0}', space=vmem, size = 0x800, scoped, tag = 'output window, operand 1, single buffered']
    #allocation9 [shape = 's32[1]{0}', space=sflag, size = 0x4, scoped, tag = 'scoped memory for tpu_custom_call.1']
    %9 = vsyncpa [#allocation3], 0
    %10 = vsyncpa [#allocation6], 0
    %11 = vsyncpa [#allocation4], 0
    %12 = vsyncpa [#allocation9], 0
    // Predicated region
    $region2: #{tpu_custom_call.1} parent=1 // pred_check
      _
    $region3: #{tpu_custom_call.1} parent=1 // pred_check_branch
      %14 = sbr.rel (0) target = $region5
    $region4: #{tpu_custom_call.1} parent=1 // pred_region
      %s16 = ssub.s32 1024, 1024
      %17 = vsyncadd [#allocation3], %s16
      %s18 = sshll.u32 [#allocation2], 4
      %s19 = int_to_ptr.vmem [resolvable:$true] %s18
      %24 = dma.hbm_to_vmem [thread:$0]  %s0, 1024, %s19, [#allocation3], 128, 128, 8
    $region5: #{tpu_custom_call.1} parent=1 // pred_fallthru
      _
    // Predicated region
    $region6: #{tpu_custom_call.1} parent=1 // pred_check
      _
    $region7: #{tpu_custom_call.1} parent=1 // pred_check_branch
      %26 = sbr.rel (0) target = $region9
    $region8: #{tpu_custom_call.1} parent=1 // pred_region
      %s28 = ssub.s32 256, 256
      %29 = vsyncadd [#allocation6], %s28
      %s30 = sshll.u32 [#allocation5], 4
      %s31 = int_to_ptr.vmem [resolvable:$true] %s30
      %36 = dma.hbm_to_vmem [thread:$0]  %s1, 256, %s31, [#allocation6], 128, 128, 8
    $region9: #{tpu_custom_call.1} parent=1 // pred_fallthru
      _
    // Predicated region
    $region10: #{tpu_custom_call.1} parent=1 // pred_check
      _
    $region11: #{tpu_custom_call.1} parent=1 // pred_check_branch
      %38 = sbr.rel (0) target = $region13
    $region12: #{tpu_custom_call.1} parent=1 // pred_region
      %39 = dma.done [#allocation3], 1024
    $region13: #{tpu_custom_call.1} parent=1 // pred_fallthru
      _
    // Predicated region
    $region14: #{tpu_custom_call.1} parent=1 // pred_check
      _
    $region15: #{tpu_custom_call.1} parent=1 // pred_check_branch
      %41 = sbr.rel (0) target = $region17
    $region16: #{tpu_custom_call.1} parent=1 // pred_region
      %42 = dma.done [#allocation6], 256
    $region17: #{tpu_custom_call.1} parent=1 // pred_fallthru
      _
    %v43 = vld [vmem:[#allocation2] sm:$0xff]
    %v44 = vld [vmem:[#allocation2 + $0x8] sm:$0xff]
    %v45 = vld [vmem:[#allocation2 + $0x10] sm:$0xff]
    %v46 = vld [vmem:[#allocation2 + $0x18] sm:$0xff]
    %v47 = vld [vmem:[#allocation2 + $0x20] sm:$0xff]
    %v48 = vld [vmem:[#allocation2 + $0x28] sm:$0xff]
    %v49 = vld [vmem:[#allocation2 + $0x30] sm:$0xff]
    %v50 = vld [vmem:[#allocation2 + $0x38] sm:$0xff]
    %v51 = vld [vmem:[#allocation5] sm:$0xff]
    %v52 = vld [vmem:[#allocation5 + $0x8] sm:$0xff]
    %vm53 = vcmp.eq.s32.totalorder %v51, 0
    %vm54 = vcmp.eq.s32.totalorder %v51, 1
    %vm55 = vcmp.eq.s32.totalorder %v51, 2
    %vm56 = vcmp.eq.s32.totalorder %v51, 3
    %vm57 = vcmp.eq.s32.totalorder %v52, 0
    %vm58 = vcmp.eq.s32.totalorder %v52, 1
    %vm59 = vcmp.eq.s32.totalorder %v52, 2
    %vm60 = vcmp.eq.s32.totalorder %v52, 3
    %v61 = vmax.f32 %v43, %v45
    %v62 = vmax.f32 %v44, %v46
    %v63 = vmax.f32 %v61, %v62
    %v64 = vmax.f32 %v47, %v49
    %v65 = vmax.f32 %v48, %v50
    %v66 = vmax.f32 %v64, %v65
    %v67 = vsub.f32 %v43, %v63
    %v68 = vsub.f32 %v44, %v63
    %v69 = vsub.f32 %v45, %v63
    %v70 = vsub.f32 %v46, %v63
    %v71 = vsub.f32 %v47, %v66
    %v72 = vsub.f32 %v48, %v66
    %v73 = vsub.f32 %v49, %v66
    %v74 = vsub.f32 %v50, %v66
    %v75 = vmul.f32 %v67, 1.442695
    %v76 = vpow.pop %v75
    %v77 = vmul.f32 %v68, 1.442695
    %v78 = vpow.pop %v77
    %v79 = vmul.f32 %v69, 1.442695
    %v80 = vpow.pop %v79
    %v81 = vmul.f32 %v70, 1.442695
    %v82 = vpow.pop %v81
    %v83 = vmul.f32 %v71, 1.442695
    %v84 = vpow.pop %v83
    %v85 = vmul.f32 %v72, 1.442695
    %v86 = vpow.pop %v85
    %v87 = vmul.f32 %v73, 1.442695
    %v88 = vpow.pop %v87
    %v89 = vmul.f32 %v74, 1.442695
    %v90 = vpow.pop %v89
    %v91 = vadd.f32 %v76, %v78
    %v92 = vadd.f32 %v91, %v80
    %v93 = vadd.f32 %v92, %v82
    %v94 = vadd.f32 %v84, %v86
    %v95 = vadd.f32 %v94, %v88
    %v96 = vadd.f32 %v95, %v90
    %v97 = vrcp.pop %v93
    %v98 = vmul.f32 %v76, %v97
    %v99 = vmul.f32 %v78, %v97
    %v100 = vmul.f32 %v80, %v97
    %v101 = vmul.f32 %v82, %v97
    %v102 = vrcp.pop %v96
    %v103 = vmul.f32 %v84, %v102
    %v104 = vmul.f32 %v86, %v102
    %v105 = vmul.f32 %v88, %v102
    %v106 = vmul.f32 %v90, %v102
    %s107 = smul.u32 0, 1024
    %v108 = vlaneseq
    %v109 = vshrl.u32 %v108, 7
    %v110 = vmul.u32 %v109, 128
    %v111 = vlaneseq
    %v112 = vand.u32 %v111, 127
    %v113 = vadd.s32 %v110, %v112
    %v114 = vstv %s107
    %v115 = vadd.s32 %v114, %v113
    %vm116 = vcmp.lt.s32.totalorder %v115, 256
    %v117 = vsel %vm116, 1, 0
    %vm118 = vcmp.eq.s32.totalorder %v117, 1
    %vm119 = vmand %vm53, %vm118
    %vm120 = vmand %vm54, %vm118
    %vm121 = vmand %vm55, %vm118
    %vm122 = vmand %vm56, %vm118
    %vm123 = vmand %vm57, %vm118
    %vm124 = vmand %vm58, %vm118
    %vm125 = vmand %vm59, %vm118
    %vm126 = vmand %vm60, %vm118
    %v127 = vsel %vm118, %v98, 0.0
    %v128 = vsel %vm118, %v99, 0.0
    %v129 = vsel %vm118, %v100, 0.0
    %v130 = vsel %vm118, %v101, 0.0
    %v131 = vsel %vm118, %v103, 0.0
    %v132 = vsel %vm118, %v104, 0.0
    %v133 = vsel %vm118, %v105, 0.0
    %v134 = vsel %vm118, %v106, 0.0
    %v135 = vsel %vm119, %v98, 0.0
    %v136 = vsel %vm120, %v99, 0.0
    %v137 = vsel %vm121, %v100, 0.0
    %v138 = vsel %vm122, %v101, 0.0
    %v139 = vsel %vm123, %v103, 0.0
    %v140 = vsel %vm124, %v104, 0.0
    %v141 = vsel %vm125, %v105, 0.0
    %v142 = vsel %vm126, %v106, 0.0
    %143 = vadd.xlane.f32.xlu0 %v135
    %v144 = vpop.xlane.xlu0 %143
    %145 = vadd.xlane.f32.xlu0 %v136
    %v146 = vpop.xlane.xlu0 %145
    %147 = vadd.xlane.f32.xlu0 %v137
    %v148 = vpop.xlane.xlu0 %147
    %149 = vadd.xlane.f32.xlu0 %v138
    %v150 = vpop.xlane.xlu0 %149
    %151 = vadd.xlane.f32.xlu0 %v139
    %v152 = vpop.xlane.xlu0 %151
    %153 = vadd.xlane.f32.xlu0 %v140
    %v154 = vpop.xlane.xlu0 %153
    %155 = vadd.xlane.f32.xlu0 %v141
    %v156 = vpop.xlane.xlu0 %155
    %157 = vadd.xlane.f32.xlu0 %v142
    %v158 = vpop.xlane.xlu0 %157
    %v167 = vlaneseq
    %v168 = vshrl.u32 %v167, 7
    %v169 = vsub.s32 %v112, %v168
    %v170 = vrot.slane %v144, %v169
    %v171 = vlaneseq
    %v172 = vshrl.u32 %v171, 7
    %v173 = vsub.s32 %v112, %v172
    %v174 = vrot.slane %v146, %v173
    %v175 = vlaneseq
    %v176 = vshrl.u32 %v175, 7
    %v177 = vsub.s32 %v112, %v176
    %v178 = vrot.slane %v148, %v177
    %v179 = vlaneseq
    %v180 = vshrl.u32 %v179, 7
    %v181 = vsub.s32 %v112, %v180
    %v182 = vrot.slane %v150, %v181
    %v183 = vlaneseq
    %v184 = vshrl.u32 %v183, 7
    %v185 = vsub.s32 %v112, %v184
    %v186 = vrot.slane %v152, %v185
    %v187 = vlaneseq
    %v188 = vshrl.u32 %v187, 7
    %v189 = vsub.s32 %v112, %v188
    %v190 = vrot.slane %v154, %v189
    %v191 = vlaneseq
    %v192 = vshrl.u32 %v191, 7
    %v193 = vsub.s32 %v112, %v192
    %v194 = vrot.slane %v156, %v193
    %v195 = vlaneseq
    %v196 = vshrl.u32 %v195, 7
    %v197 = vsub.s32 %v112, %v196
    %v198 = vrot.slane %v158, %v197
    %vm199 = vcmask 1041409
    %v200 = vsel %vm199, %v174, %v170
    %vm201 = vcmask 1042434
    %v202 = vsel %vm201, %v178, %v200
    %vm203 = vcmask 1043459
    %v204 = vsel %vm203, %v182, %v202
    %v205 = vsel %vm199, %v190, %v186
    %v206 = vsel %vm201, %v194, %v205
    %v207 = vsel %vm203, %v198, %v206
    %vm210 = vcmask 60416
    %v211 = vsel %vm210, %v204, 0.0
    %212 = vadd.xlane.f32.xlu0 %v211
    %v213 = vpop.xlane.xlu0 %212
    %v214 = vsel %vm210, %v207, 0.0
    %215 = vadd.xlane.f32.xlu0 %v214
    %v216 = vpop.xlane.xlu0 %215
    %217 = vadd.xlane.f32.xlu0 %v127
    %v218 = vpop.xlane.xlu0 %217
    %219 = vadd.xlane.f32.xlu0 %v128
    %v220 = vpop.xlane.xlu0 %219
    %221 = vadd.xlane.f32.xlu0 %v129
    %v222 = vpop.xlane.xlu0 %221
    %223 = vadd.xlane.f32.xlu0 %v130
    %v224 = vpop.xlane.xlu0 %223
    %225 = vadd.xlane.f32.xlu0 %v131
    %v226 = vpop.xlane.xlu0 %225
    %227 = vadd.xlane.f32.xlu0 %v132
    %v228 = vpop.xlane.xlu0 %227
    %229 = vadd.xlane.f32.xlu0 %v133
    %v230 = vpop.xlane.xlu0 %229
    %231 = vadd.xlane.f32.xlu0 %v134
    %v232 = vpop.xlane.xlu0 %231
    %v241 = vlaneseq
    %v242 = vshrl.u32 %v241, 7
    %v243 = vsub.s32 %v112, %v242
    %v244 = vrot.slane %v218, %v243
    %v245 = vlaneseq
    %v246 = vshrl.u32 %v245, 7
    %v247 = vsub.s32 %v112, %v246
    %v248 = vrot.slane %v220, %v247
    %v249 = vlaneseq
    %v250 = vshrl.u32 %v249, 7
    %v251 = vsub.s32 %v112, %v250
    %v252 = vrot.slane %v222, %v251
    %v253 = vlaneseq
    %v254 = vshrl.u32 %v253, 7
    %v255 = vsub.s32 %v112, %v254
    %v256 = vrot.slane %v224, %v255
    %v257 = vlaneseq
    %v258 = vshrl.u32 %v257, 7
    %v259 = vsub.s32 %v112, %v258
    %v260 = vrot.slane %v226, %v259
    %v261 = vlaneseq
    %v262 = vshrl.u32 %v261, 7
    %v263 = vsub.s32 %v112, %v262
    %v264 = vrot.slane %v228, %v263
    %v265 = vlaneseq
    %v266 = vshrl.u32 %v265, 7
    %v267 = vsub.s32 %v112, %v266
    %v268 = vrot.slane %v230, %v267
    %v269 = vlaneseq
    %v270 = vshrl.u32 %v269, 7
    %v271 = vsub.s32 %v112, %v270
    %v272 = vrot.slane %v232, %v271
    %v273 = vsel %vm199, %v248, %v244
    %v274 = vsel %vm201, %v252, %v273
    %v275 = vsel %vm203, %v256, %v274
    %v276 = vsel %vm199, %v264, %v260
    %v277 = vsel %vm201, %v268, %v276
    %v278 = vsel %vm203, %v272, %v277
    %v281 = vsel %vm210, %v275, 0.0
    %282 = vadd.xlane.f32.xlu0 %v281
    %v283 = vpop.xlane.xlu0 %282
    %v284 = vsel %vm210, %v278, 0.0
    %285 = vadd.xlane.f32.xlu0 %v284
    %v286 = vpop.xlane.xlu0 %285
    %v287 = vsel %vm119, 1.0, 0.0
    %v288 = vsel %vm120, 1.0, 0.0
    %v289 = vsel %vm121, 1.0, 0.0
    %v290 = vsel %vm122, 1.0, 0.0
    %v291 = vsel %vm123, 1.0, 0.0
    %v292 = vsel %vm124, 1.0, 0.0
    %v293 = vsel %vm125, 1.0, 0.0
    %v294 = vsel %vm126, 1.0, 0.0
    %295 = vadd.xlane.f32.xlu0 %v287
    %v296 = vpop.xlane.xlu0 %295
    %297 = vadd.xlane.f32.xlu0 %v288
    %v298 = vpop.xlane.xlu0 %297
    %299 = vadd.xlane.f32.xlu0 %v289
    %v300 = vpop.xlane.xlu0 %299
    %301 = vadd.xlane.f32.xlu0 %v290
    %v302 = vpop.xlane.xlu0 %301
    %303 = vadd.xlane.f32.xlu0 %v291
    %v304 = vpop.xlane.xlu0 %303
    %305 = vadd.xlane.f32.xlu0 %v292
    %v306 = vpop.xlane.xlu0 %305
    %307 = vadd.xlane.f32.xlu0 %v293
    %v308 = vpop.xlane.xlu0 %307
    %309 = vadd.xlane.f32.xlu0 %v294
    %v310 = vpop.xlane.xlu0 %309
    %v319 = vlaneseq
    %v320 = vshrl.u32 %v319, 7
    %v321 = vsub.s32 %v112, %v320
    %v322 = vrot.slane %v296, %v321
    %v323 = vlaneseq
    %v324 = vshrl.u32 %v323, 7
    %v325 = vsub.s32 %v112, %v324
    %v326 = vrot.slane %v298, %v325
    %v327 = vlaneseq
    %v328 = vshrl.u32 %v327, 7
    %v329 = vsub.s32 %v112, %v328
    %v330 = vrot.slane %v300, %v329
    %v331 = vlaneseq
    %v332 = vshrl.u32 %v331, 7
    %v333 = vsub.s32 %v112, %v332
    %v334 = vrot.slane %v302, %v333
    %v335 = vlaneseq
    %v336 = vshrl.u32 %v335, 7
    %v337 = vsub.s32 %v112, %v336
    %v338 = vrot.slane %v304, %v337
    %v339 = vlaneseq
    %v340 = vshrl.u32 %v339, 7
    %v341 = vsub.s32 %v112, %v340
    %v342 = vrot.slane %v306, %v341
    %v343 = vlaneseq
    %v344 = vshrl.u32 %v343, 7
    %v345 = vsub.s32 %v112, %v344
    %v346 = vrot.slane %v308, %v345
    %v347 = vlaneseq
    %v348 = vshrl.u32 %v347, 7
    %v349 = vsub.s32 %v112, %v348
    %v350 = vrot.slane %v310, %v349
    %v351 = vsel %vm199, %v326, %v322
    %v352 = vsel %vm201, %v330, %v351
    %v353 = vsel %vm203, %v334, %v352
    %v354 = vsel %vm199, %v342, %v338
    %v355 = vsel %vm201, %v346, %v354
    %v356 = vsel %vm203, %v350, %v355
    %v359 = vsel %vm210, %v353, 0.0
    %360 = vadd.xlane.f32.xlu0 %v359
    %v361 = vpop.xlane.xlu0 %360
    %v362 = vsel %vm210, %v356, 0.0
    %363 = vadd.xlane.f32.xlu0 %v362
    %v364 = vpop.xlane.xlu0 %363
    %v365 = vadd.f32 %v283, %v361
    %v366 = vadd.f32 %v286, %v364
    %v369 = vlaneseq
    %v370 = vshrl.u32 %v369, 7
    %v371 = vsub.s32 %v112, %v370
    %v372 = vrot.slane %v213, %v371
    %v373 = vlaneseq
    %v374 = vshrl.u32 %v373, 7
    %v375 = vsub.s32 %v112, %v374
    %v376 = vrot.slane %v216, %v375
    %v377 = vsel %vm199, %v376, %v372
    %vm379 = vcmask 25600
    %380 = vst.msk [vmem:[#allocation8] sm:$0x3] %vm379, %v377
    %v383 = vlaneseq
    %v384 = vshrl.u32 %v383, 7
    %v385 = vsub.s32 %v112, %v384
    %v386 = vrot.slane %v365, %v385
    %v387 = vlaneseq
    %v388 = vshrl.u32 %v387, 7
    %v389 = vsub.s32 %v112, %v388
    %v390 = vrot.slane %v366, %v389
    %v391 = vsel %vm199, %v390, %v386
    %s393 = scalar_lea.vmem [#allocation8], 2
    %394 = vst.msk [vmem:[%s393] sm:$0x3] %vm379, %v391
    %v395 = vlog2.pop %v93
    %v396 = vmul.f32 %v395, 0.6931472
    %v397 = vlog2.pop %v96
    %v398 = vmul.f32 %v397, 0.6931472
    %v399 = vadd.f32 %v63, %v396
    %v400 = vadd.f32 %v66, %v398
    %v401 = vsel %vm53, %v43, 0.0
    %v402 = vsel %vm54, %v44, 0.0
    %v403 = vsel %vm55, %v45, 0.0
    %v404 = vsel %vm56, %v46, 0.0
    %v405 = vsel %vm57, %v47, 0.0
    %v406 = vsel %vm58, %v48, 0.0
    %v407 = vsel %vm59, %v49, 0.0
    %v408 = vsel %vm60, %v50, 0.0
    %v409 = vadd.f32 %v401, %v402
    %v410 = vadd.f32 %v409, %v403
    %v411 = vadd.f32 %v410, %v404
    %v412 = vadd.f32 %v405, %v406
    %v413 = vadd.f32 %v412, %v407
    %v414 = vadd.f32 %v413, %v408
    %v415 = vsub.f32 %v399, %v411
    %v416 = vsub.f32 %v400, %v414
    %v417 = vsel %vm118, %v415, -inf
    %v418 = vsel %vm118, %v416, -inf
    %419 = vst [vmem:[#allocation7] sm:$0xff] %v417
    %420 = vst [vmem:[#allocation7 + $0x8] sm:$0xff] %v418
    // Predicated region
    $region18: #{tpu_custom_call.1} parent=1 // pred_check
      _
    $region19: #{tpu_custom_call.1} parent=1 // pred_check_branch
      %422 = sbr.rel (0) target = $region21
    $region20: #{tpu_custom_call.1} parent=1 // pred_region
      %s424 = ssub.s32 256, 256
      %425 = vsyncadd [#allocation4], %s424
      %s426 = sshll.u32 [#allocation7], 4
      %s427 = int_to_ptr.vmem [resolvable:$true] %s426
      %432 = dma.vmem_to_hbm [thread:$0]  %s427, 256, %s2, [#allocation4], 128, 128, 8
    $region21: #{tpu_custom_call.1} parent=1 // pred_fallthru
      _
    // Predicated region
    $region22: #{tpu_custom_call.1} parent=1 // pred_check
      _
    $region23: #{tpu_custom_call.1} parent=1 // pred_check_branch
      %434 = sbr.rel (0) target = $region25
    $region24: #{tpu_custom_call.1} parent=1 // pred_region
      %s436 = ssub.s32 64, 64
      %437 = vsyncadd [#allocation9], %s436
      %s438 = sshll.u32 [#allocation8], 4
      %s439 = int_to_ptr.vmem [resolvable:$true] %s438
      %444 = dma.vmem_to_hbm [thread:$0]  %s439, 64, %s3, [#allocation9], 32, 32, 2
    $region25: #{tpu_custom_call.1} parent=1 // pred_fallthru
      _
    // Predicated region
    $region26: #{tpu_custom_call.1} parent=1 // pred_check
      _
    $region27: #{tpu_custom_call.1} parent=1 // pred_check_branch
      %446 = sbr.rel (0) target = $region29
    $region28: #{tpu_custom_call.1} parent=1 // pred_region
      %447 = dma.done [#allocation4], 256
    $region29: #{tpu_custom_call.1} parent=1 // pred_fallthru
      _
    // Predicated region
    $region30: #{tpu_custom_call.1} parent=1 // pred_check
      _
    $region31: #{tpu_custom_call.1} parent=1 // pred_check_branch
      %449 = sbr.rel (0) target = $region33
    $region32: #{tpu_custom_call.1} parent=1 // pred_region
      %450 = dma.done [#allocation9], 64
    $region33: #{tpu_custom_call.1} parent=1 // pred_fallthru
      _
    %451 = vsyncpa [#allocation3], 1
    %452 = vsyncpa [#allocation6], 1
    %453 = vsyncpa [#allocation4], 1
    %454 = vsyncpa [#allocation9], 1

</llo_original>
